<compile_context>
chip_gen: v5e
topology: v5e:2x2
jax: 0.10.0
libtpu: 0.0.40
codegen_flags: <defaults>
</compile_context>

<pallas_src>
import functools

import jax
import jax.numpy as jnp
from jax.experimental import pallas as pl
from jax.experimental.pallas import tpu as pltpu

_LANES = 128


def _round_up(x, m):
    return ((x + m - 1) // m) * m


def _classifier_kernel(x_ref, w1_ref, b1_ref, w2_ref, b2_ref, o_ref, acc_ref,
                       *, pool_type, seq_len, seq_tile, inv_seq_len):
    # x_ref : (Bt, St, H)      w1_ref: (H, 128)    b1_ref: (1, 128)
    # w2_ref: (128, Cp)        b2_ref: (1, Cp)     o_ref : (Bt, Cp)
    # acc_ref: (Bt, H) f32 scratch -- running pooled value across the S grid axis.
    s = pl.program_id(1)
    last_s = pl.num_programs(1) - 1

    @pl.when(s == 0)
    def _init():
        if pool_type == "mean":
            acc_ref[...] = jnp.zeros(acc_ref.shape, acc_ref.dtype)
        else:  # max
            acc_ref[...] = jnp.full(acc_ref.shape, -jnp.inf, acc_ref.dtype)

    x = x_ref[...]                                        # (Bt, St, H) input dtype

    # Ragged final S-tile handled in-kernel (no wrapper-side padding copy of x):
    # positions >= true seq_len are replaced by the pooling-neutral value.
    if seq_len % seq_tile != 0:
        pos = jax.lax.broadcasted_iota(jnp.int32, (x.shape[1], x.shape[2]), 0)
        valid = (s * seq_tile + pos) < seq_len            # (St, H) bool
        if pool_type == "mean":
            neutral = jnp.zeros((), x.dtype)
        else:
            neutral = jnp.asarray(-jnp.inf, x.dtype)
        x = jnp.where(valid[None, :, :], x, neutral)      # select: garbage-safe

    if pool_type == "mean":
        # Accumulate in f32 without materializing a full f32 copy of the tile.
        acc_ref[...] += jnp.sum(x, axis=1, dtype=jnp.float32)
    else:
        acc_ref[...] = jnp.maximum(acc_ref[...],
                                   jnp.max(x, axis=1).astype(jnp.float32))

    @pl.when(s == last_s)
    def _finalize():
        pooled = acc_ref[...]                             # (Bt, H) f32
        if pool_type == "mean":
            pooled = pooled * inv_seq_len                 # divide by TRUE S

        # Linear(H, 128) + ReLU
        h = jnp.dot(pooled, w1_ref[...], preferred_element_type=jnp.float32)
        h = jnp.maximum(h + b1_ref[...], 0.0)

        # Dropout(0.3) -> identity in eval mode.
        # Linear(128, C) on a lane-padded (128-wide) output tile.
        out = jnp.dot(h, w2_ref[...], preferred_element_type=jnp.float32)
        o_ref[...] = (out + b2_ref[...]).astype(o_ref.dtype)


def classifier_forward(x, w1, b1, w2, b2, *, pool_type="mean",
                       batch_tile=None, seq_tile=None):
    """x: (B, S, H). w1: (H, 128), b1: (128,), w2: (128, C), b2: (C,).
    Returns (B, C) float32."""
    if pool_type not in ("mean", "max"):
        raise ValueError(f"unsupported pool_type: {pool_type}")
    if pool_type == "max" and not jnp.issubdtype(x.dtype, jnp.floating):
        raise ValueError("max pooling requires a floating-point input dtype")

    B, S, H = x.shape
    Hm = w1.shape[1]                     # 128 (MLP hidden)
    C = w2.shape[1]                      # num_classes
    Cp = _round_up(C, _LANES)            # lane-dense output width
    itemsize = jnp.dtype(x.dtype).itemsize
    sub_x = max(8, 32 // itemsize)       # sublane multiple: 8 f32 / 16 bf16 / 32 int8

    # ---- batch tile --------------------------------------------------------
    user_bt = batch_tile is not None
    if batch_tile is None:
        batch_tile = 128                 # longer-S / smaller-B aspect ratio
    Bt = min(batch_tile, B)
    if Bt < B:
        Bt = max(8, (Bt // 8) * 8)       # second-minor of f32 acc/output blocks
    # Ensure >=2 batch tiles so the "parallel" axis can shard across the two
    # v7x TensorCores (no-op cost on single-TC v5e/v6e).
    if not user_bt and Bt >= B and B >= 16:
        Bt = min(B, _round_up(pl.cdiv(B, 2), 8))

    # ---- seq tile ----------------------------------------------------------
    if seq_tile is None:
        # ~8 MiB per x buffer (double-buffered -> 16 MiB), long contiguous runs.
        budget = 8 * 1024 * 1024
        seq_tile = max(sub_x, budget // max(1, Bt * H * itemsize))
    St = min(seq_tile, S)
    if St < S:
        St = max(sub_x, (St // sub_x) * sub_x)

    grid = (pl.cdiv(B, Bt), pl.cdiv(S, St))

    # ---- weights / biases (lane-pad the output side to 128) ---------------
    b1_2d = b1.reshape(1, Hm)
    if Cp != C:
        w2 = jnp.pad(w2, ((0, 0), (0, Cp - C)))
        b2 = jnp.pad(b2, ((0, Cp - C),))
    b2_2d = b2.reshape(1, Cp)

    # ---- VMEM sizing / cost hint ------------------------------------------
    vmem_needed = (
        2 * Bt * St * H * itemsize                      # double-buffered x tiles
        + Bt * H * 4                                    # pooled accumulator scratch
        + 2 * Bt * Cp * 4                               # double-buffered output tile
        + 2 * (H * Hm + Hm + Hm * Cp + Cp) * 4          # resident weights / biases
    )
    # Cap at 40 MiB so the same config is comfortable on v7x (64 MiB VMEM).
    vmem_limit = int(min(max(vmem_needed + (8 << 20), 16 << 20), 40 << 20))
    vmem_limit = max(vmem_limit, int(vmem_needed * 1.25))

    cost = pl.CostEstimate(
        flops=2 * B * (H * Hm + Hm * Cp) + B * S * H,
        transcendentals=0,
        bytes_accessed=(B * S * H * itemsize
                        + (H * Hm + Hm + Hm * Cp + Cp) * 4
                        + B * Cp * 4),
    )

    kernel = functools.partial(_classifier_kernel,
                               pool_type=pool_type,
                               seq_len=S,
                               seq_tile=St,
                               inv_seq_len=1.0 / float(S))

    out_padded = pl.pallas_call(
        kernel,
        out_shape=jax.ShapeDtypeStruct((B, Cp), jnp.float32),
        grid=grid,
        in_specs=[
            pl.BlockSpec((Bt, St, H), lambda b, s: (b, s, 0)),   # x tiles (streamed)
            pl.BlockSpec((H, Hm), lambda b, s: (0, 0)),          # w1 (resident)
            pl.BlockSpec((1, Hm), lambda b, s: (0, 0)),          # b1 (resident)
            pl.BlockSpec((Hm, Cp), lambda b, s: (0, 0)),         # w2 padded (resident)
            pl.BlockSpec((1, Cp), lambda b, s: (0, 0)),          # b2 padded (resident)
        ],
        out_specs=pl.BlockSpec((Bt, Cp), lambda b, s: (b, 0)),   # same block across S
        scratch_shapes=[pltpu.VMEM((Bt, H), jnp.float32)],       # pooled accumulator
        compiler_params=pltpu.CompilerParams(
            dimension_semantics=("parallel", "arbitrary"),
            vmem_limit_bytes=vmem_limit,
        ),
        cost_estimate=cost,
    )(x, w1, b1_2d, w2, b2_2d)

    return out_padded[:, :C]


# ---------------------------------------------------------------------------
# Reference + test harness
# ---------------------------------------------------------------------------
def _init_linear(key, fan_in, fan_out):
    """Deterministic PyTorch-style uniform init: U(-1/sqrt(fan_in), 1/sqrt(fan_in))."""
    kw, kb = jax.random.split(key)
    bound = 1.0 / jnp.sqrt(jnp.float32(fan_in))
    w = jax.random.uniform(kw, (fan_in, fan_out), jnp.float32, -bound, bound)
    b = jax.random.uniform(kb, (fan_out,), jnp.float32, -bound, bound)
    return w, b


def _reference_forward(x, w1, b1, w2, b2, pool_type="mean"):
    if pool_type == "mean":
        pooled = jnp.mean(x, axis=1)
    else:
        pooled = jnp.max(x, axis=1)
    h = jnp.maximum(pooled @ w1 + b1, 0.0)
    return h @ w2 + b2


if __name__ == "__main__":
    # Small shapes consistent with the module: Classifier uses hidden_dim=128.
    H = 128
    MLP_HIDDEN = 128
    NUM_CLASSES = 8

    key = jax.random.PRNGKey(0)
    kx, k1, k2, kx2, kx3 = jax.random.split(key, 5)

    w1, b1 = _init_linear(k1, H, MLP_HIDDEN)
    w2, b2 = _init_linear(k2, MLP_HIDDEN, NUM_CLASSES)

    # Test 1: mean pooling, B=2, S=8 (single-tile path, full-dim blocks).
    B, S = 2, 8
    x = jax.random.normal(kx, (B, S, H), jnp.float32)
    out = classifier_forward(x, w1, b1, w2, b2, pool_type="mean")
    out = jax.block_until_ready(out)
    ref = _reference_forward(x, w1, b1, w2, b2, pool_type="mean")
    assert out.shape == (B, NUM_CLASSES), out.shape
    assert jnp.allclose(out, ref, atol=1e-5, rtol=1e-5), (out, ref)

    # Test 2: max pooling, multi-step S reduction with exact tiling.
    B2, S2 = 3, 24
    x2 = jax.random.normal(kx2, (B2, S2, H), jnp.float32)
    out2 = classifier_forward(x2, w1, b1, w2, b2, pool_type="max", seq_tile=8)
    out2 = jax.block_until_ready(out2)
    ref2 = _reference_forward(x2, w1, b1, w2, b2, pool_type="max")
    assert out2.shape == (B2, NUM_CLASSES), out2.shape
    assert jnp.allclose(out2, ref2, atol=1e-5, rtol=1e-5), (out2, ref2)

    # Test 3: mean with a RAGGED final S tile (in-kernel masking, no jnp.pad).
    out3 = classifier_forward(x2, w1, b1, w2, b2, pool_type="mean", seq_tile=16)
    out3 = jax.block_until_ready(out3)
    ref3 = _reference_forward(x2, w1, b1, w2, b2, pool_type="mean")
    assert jnp.allclose(out3, ref3, atol=1e-5, rtol=1e-5), (out3, ref3)

    # Test 4: max with a RAGGED final S tile (-inf masking path).
    out4 = classifier_forward(x2, w1, b1, w2, b2, pool_type="max", seq_tile=16)
    out4 = jax.block_until_ready(out4)
    ref4 = _reference_forward(x2, w1, b1, w2, b2, pool_type="max")
    assert jnp.allclose(out4, ref4, atol=1e-5, rtol=1e-5), (out4, ref4)

    # Test 5: ragged batch axis + automatic >=2 batch-tile split (B=20 -> Bt=16),
    # default tile derivation (long-S tiles, no wrapper padding anywhere).
    B3, S3 = 20, 24
    x3 = jax.random.normal(kx3, (B3, S3, H), jnp.float32)
    out5 = classifier_forward(x3, w1, b1, w2, b2, pool_type="mean")
    out5 = jax.block_until_ready(out5)
    ref5 = _reference_forward(x3, w1, b1, w2, b2, pool_type="mean")
    assert out5.shape == (B3, NUM_CLASSES), out5.shape
    assert jnp.allclose(out5, ref5, atol=1e-5, rtol=1e-5), (out5, ref5)

    print("KERNEL_OK")
</pallas_src>

<mosaic_0001>
module attributes {stable_mosaic.version = 11 : i64} {
  func.func @_classifier_kernel(%arg0: i32, %arg1: i32, %arg2: memref<2x8x128xf32, #tpu.memory_space<vmem>>, %arg3: memref<128x128xf32, #tpu.memory_space<vmem>>, %arg4: memref<1x128xf32, #tpu.memory_space<vmem>>, %arg5: memref<128x128xf32, #tpu.memory_space<vmem>>, %arg6: memref<1x128xf32, #tpu.memory_space<vmem>>, %arg7: memref<2x128xf32, #tpu.memory_space<vmem>>, %arg8: memref<2x128xf32, #tpu.memory_space<vmem>>) attributes {dimension_semantics = [#tpu.dimension_semantics<parallel>, #tpu.dimension_semantics<arbitrary>], iteration_bounds = array<i64: 1, 1>, scalar_prefetch = 0 : i64, scratch_operands = 1 : i64, tpu.core_type = #tpu.core_type<tc>, window_params = [{transform_indices = @transform_0, window_bounds = array<i64: 2, 8, 128>}, {pipeline_mode = #tpu.pipeline_mode<synchronous>, transform_indices = @transform_1, window_bounds = array<i64: 128, 128>}, {pipeline_mode = #tpu.pipeline_mode<synchronous>, transform_indices = @transform_2, window_bounds = array<i64: 1, 128>}, {pipeline_mode = #tpu.pipeline_mode<synchronous>, transform_indices = @transform_3, window_bounds = array<i64: 128, 128>}, {pipeline_mode = #tpu.pipeline_mode<synchronous>, transform_indices = @transform_4, window_bounds = array<i64: 1, 128>}, {transform_indices = @transform_5, window_bounds = array<i64: 2, 128>}]} {
    %c0_i32 = arith.constant 0 : i32
    %0 = arith.cmpi eq, %arg1, %c0_i32 : i32
    %1 = arith.extui %0 : i1 to i32
    %c0_i32_0 = arith.constant 0 : i32
    %2 = arith.cmpi ne, %1, %c0_i32_0 : i32
    scf.if %2 {
      %cst_9 = arith.constant 0.000000e+00 : f32
      %11 = vector.broadcast %cst_9 : f32 to vector<2x128xf32>
      %c0_10 = arith.constant 0 : index
      %c0_11 = arith.constant 0 : index
      %12 = vector.load %arg8[%c0_10, %c0_11] : memref<2x128xf32, #tpu.memory_space<vmem>>, vector<2x128xf32>
      tpu.vector_store %arg8[%c0_10, %c0_11], %11 {strides = array<i32>} : memref<2x128xf32, #tpu.memory_space<vmem>>, vector<2x128xf32>,
    } else {
    }
    %c0 = arith.constant 0 : index
    %c0_1 = arith.constant 0 : index
    %c0_2 = arith.constant 0 : index
    %3 = vector.load %arg2[%c0, %c0_1, %c0_2] : memref<2x8x128xf32, #tpu.memory_space<vmem>>, vector<2x8x128xf32>
    %c0_3 = arith.constant 0 : index
    %c0_4 = arith.constant 0 : index
    %4 = vector.load %arg8[%c0_3, %c0_4] : memref<2x128xf32, #tpu.memory_space<vmem>>, vector<2x128xf32>
    %cst = arith.constant dense<0.000000e+00> : vector<2x128xf32>
    %5 = vector.multi_reduction <add>, %3, %cst [1] : vector<2x8x128xf32> to vector<2x128xf32>
    %6 = arith.addf %4, %5 : vector<2x128xf32>
    %c0_5 = arith.constant 0 : index
    %c0_6 = arith.constant 0 : index
    %7 = vector.load %arg8[%c0_5, %c0_6] : memref<2x128xf32, #tpu.memory_space<vmem>>, vector<2x128xf32>
    tpu.vector_store %arg8[%c0_5, %c0_6], %6 {strides = array<i32>} : memref<2x128xf32, #tpu.memory_space<vmem>>, vector<2x128xf32>,
    %c0_i32_7 = arith.constant 0 : i32
    %8 = arith.cmpi eq, %arg1, %c0_i32_7 : i32
    %9 = arith.extui %8 : i1 to i32
    %c0_i32_8 = arith.constant 0 : i32
    %10 = arith.cmpi ne, %9, %c0_i32_8 : i32
    scf.if %10 {
      %c0_9 = arith.constant 0 : index
      %c0_10 = arith.constant 0 : index
      %11 = vector.load %arg8[%c0_9, %c0_10] : memref<2x128xf32, #tpu.memory_space<vmem>>, vector<2x128xf32>
      %cst_11 = arith.constant 1.250000e-01 : f32
      %12 = vector.broadcast %cst_11 : f32 to vector<2x128xf32>
      %13 = arith.mulf %11, %12 : vector<2x128xf32>
      %c0_12 = arith.constant 0 : index
      %c0_13 = arith.constant 0 : index
      %14 = vector.load %arg3[%c0_12, %c0_13] : memref<128x128xf32, #tpu.memory_space<vmem>>, vector<128x128xf32>
      %cst_14 = arith.constant dense<0.000000e+00> : vector<2x128xf32>
      %15 = tpu.matmul %13, %14, %cst_14 {dimension_numbers = #tpu.dot_dimension_numbers<[1], [0], [0], [1], [0, 0, 1, 1], [], []>} : vector<2x128xf32>, vector<128x128xf32>, vector<2x128xf32> -> vector<2x128xf32>
      %c0_15 = arith.constant 0 : index
      %c0_16 = arith.constant 0 : index
      %16 = vector.load %arg4[%c0_15, %c0_16] : memref<1x128xf32, #tpu.memory_space<vmem>>, vector<1x128xf32>
      %17 = vector.broadcast %16 : vector<1x128xf32> to vector<2x128xf32>
      %18 = arith.addf %15, %17 : vector<2x128xf32>
      %cst_17 = arith.constant 0.000000e+00 : f32
      %19 = vector.broadcast %cst_17 : f32 to vector<2x128xf32>
      %20 = arith.maximumf %18, %19 : vector<2x128xf32>
      %c0_18 = arith.constant 0 : index
      %c0_19 = arith.constant 0 : index
      %21 = vector.load %arg5[%c0_18, %c0_19] : memref<128x128xf32, #tpu.memory_space<vmem>>, vector<128x128xf32>
      %cst_20 = arith.constant dense<0.000000e+00> : vector<2x128xf32>
      %22 = tpu.matmul %20, %21, %cst_20 {dimension_numbers = #tpu.dot_dimension_numbers<[1], [0], [0], [1], [0, 0, 1, 1], [], []>} : vector<2x128xf32>, vector<128x128xf32>, vector<2x128xf32> -> vector<2x128xf32>
      %c0_21 = arith.constant 0 : index
      %c0_22 = arith.constant 0 : index
      %23 = vector.load %arg6[%c0_21, %c0_22] : memref<1x128xf32, #tpu.memory_space<vmem>>, vector<1x128xf32>
      %24 = vector.broadcast %23 : vector<1x128xf32> to vector<2x128xf32>
      %25 = arith.addf %22, %24 : vector<2x128xf32>
      %c0_23 = arith.constant 0 : index
      %c0_24 = arith.constant 0 : index
      %26 = vector.load %arg7[%c0_23, %c0_24] : memref<2x128xf32, #tpu.memory_space<vmem>>, vector<2x128xf32>
      tpu.vector_store %arg7[%c0_23, %c0_24], %25 {strides = array<i32>} : memref<2x128xf32, #tpu.memory_space<vmem>>, vector<2x128xf32>,
    } else {
    }
    return
  }
  func.func @transform_0(%arg0: i32, %arg1: i32) -> (i32, i32, i32) {
    %c0_i32 = arith.constant 0 : i32
    %c0_i32_0 = arith.constant 0 : i32
    return %arg0, %arg1, %c0_i32 : i32, i32, i32
  }
  func.func @transform_1(%arg0: i32, %arg1: i32) -> (i32, i32) {
    %c0_i32 = arith.constant 0 : i32
    %c0_i32_0 = arith.constant 0 : i32
    %c0_i32_1 = arith.constant 0 : i32
    return %c0_i32, %c0_i32_0 : i32, i32
  }
  func.func @transform_2(%arg0: i32, %arg1: i32) -> (i32, i32) {
    %c0_i32 = arith.constant 0 : i32
    %c0_i32_0 = arith.constant 0 : i32
    %c0_i32_1 = arith.constant 0 : i32
    return %c0_i32, %c0_i32_0 : i32, i32
  }
  func.func @transform_3(%arg0: i32, %arg1: i32) -> (i32, i32) {
    %c0_i32 = arith.constant 0 : i32
    %c0_i32_0 = arith.constant 0 : i32
    %c0_i32_1 = arith.constant 0 : i32
    return %c0_i32, %c0_i32_0 : i32, i32
  }
  func.func @transform_4(%arg0: i32, %arg1: i32) -> (i32, i32) {
    %c0_i32 = arith.constant 0 : i32
    %c0_i32_0 = arith.constant 0 : i32
    %c0_i32_1 = arith.constant 0 : i32
    return %c0_i32, %c0_i32_0 : i32, i32
  }
  func.func @transform_5(%arg0: i32, %arg1: i32) -> (i32, i32) {
    %c0_i32 = arith.constant 0 : i32
    %c0_i32_0 = arith.constant 0 : i32
    return %arg0, %c0_i32 : i32, i32
  }
}

</mosaic_0001>

<llo_original>
// kernel: tpu_custom_call.1
$region0: #{tpu_custom_call.1}
  #allocation0 [shape = 'u32[]', space=smem, size = 0x4, offset = 0x4, fixed_abs, tag = 'smem constant byte address 0x4 - core index']
  #allocation1 [shape = 'u32[72,128]{1,0:T(1,128)}', space=vmem, size = 0x9000, scoped, tag = 'internal scratch']
  #allocation2 [shape = 'f32[2,128]{1,0:T(2,128)}', space=vmem, size = 0x400, scoped, tag = 'scratch operand']
  %s0 = inlined_call_operand.hbm [shape: f32[2,8,128], index: 0, kind: input, shape index: {}]
  %s1 = inlined_call_operand.hbm [shape: f32[128,128], index: 1, kind: input, shape index: {}]
  %s2 = inlined_call_operand.vmem [shape: f32[1,128], index: 2, kind: input, shape index: {}]
  %s3 = inlined_call_operand.hbm [shape: f32[128,128], index: 3, kind: input, shape index: {}]
  %s4 = inlined_call_operand.vmem [shape: f32[1,128], index: 4, kind: input, shape index: {}]
  %s5 = inlined_call_operand.hbm [shape: f32[2,128], index: 5, kind: output, shape index: {}]
  %s6 = sld [smem:[#allocation0]]
  $region50: #{tpu_custom_call.1} parent=0
    _
  %s8 = ssub.s32 1, %s6
  %s9 = scalar_select 0, %s8, %s6
  $region1: #{tpu_custom_call.1} parent=0
    #allocation3 [shape = 'u8[8192]{0}', space=vmem, size = 0x2000, scoped, tag = 'input window, operand 0, single buffered']
    #allocation4 [shape = 's32[1]{0}', space=sflag, size = 0x4, scoped, tag = 'scoped memory for tpu_custom_call.1']
    #allocation5 [shape = 's32[1]{0}', space=sflag, size = 0x4, scoped, tag = 'scoped memory for tpu_custom_call.1']
    #allocation6 [shape = 'u8[65536]{0}', space=vmem, size = 0x10000, scoped, tag = 'input window, operand 1, single buffered']
    #allocation7 [shape = 's32[1]{0}', space=sflag, size = 0x4, scoped, tag = 'scoped memory for tpu_custom_call.1']
    #allocation8 [shape = 'u8[65536]{0}', space=vmem, size = 0x10000, scoped, tag = 'input window, operand 3, single buffered']
    #allocation9 [shape = 'u8[1024]{0}', space=vmem, size = 0x400, scoped, tag = 'output window, operand 0, single buffered']
    %10 = vsyncpa [#allocation4], 0
    %11 = vsyncpa [#allocation7], 0
    %12 = vsyncpa [#allocation5], 0
    // Predicated region
    $region2: #{tpu_custom_call.1} parent=1 // pred_check
      _
    $region3: #{tpu_custom_call.1} parent=1 // pred_check_branch
      %14 = sbr.rel (0) target = $region5
    $region4: #{tpu_custom_call.1} parent=1 // pred_region
      %16 = vsyncadd [#allocation4], 0
      %s17 = sshll.u32 %s0, 4
      %s18 = int_to_ptr.hbm [resolvable:$true] %s17
      %s19 = sshll.u32 [#allocation3], 4
      %s20 = int_to_ptr.vmem [resolvable:$true] %s19
      %25 = dma.hbm_to_vmem [thread:$0]  %s18, 256, %s20, [#allocation4], 128, 128, 8
    $region5: #{tpu_custom_call.1} parent=1 // pred_fallthru
      _
    // Predicated region
    $region6: #{tpu_custom_call.1} parent=1 // pred_check
      _
    $region7: #{tpu_custom_call.1} parent=1 // pred_check_branch
      %27 = sbr.rel (0) target = $region9
    $region8: #{tpu_custom_call.1} parent=1 // pred_region
      %29 = vsyncadd [#allocation7], 0
      %s30 = sshll.u32 %s1, 4
      %s31 = int_to_ptr.hbm [resolvable:$true] %s30
      %s32 = sshll.u32 [#allocation6], 4
      %s33 = int_to_ptr.vmem [resolvable:$true] %s32
      %38 = dma.hbm_to_vmem [thread:$0]  %s31, 2048, %s33, [#allocation7], 128, 128, 8
    $region9: #{tpu_custom_call.1} parent=1 // pred_fallthru
      _
    // Predicated region
    $region10: #{tpu_custom_call.1} parent=1 // pred_check
      _
    $region11: #{tpu_custom_call.1} parent=1 // pred_check_branch
      %40 = sbr.rel (0) target = $region13
    $region12: #{tpu_custom_call.1} parent=1 // pred_region
      _
    $region13: #{tpu_custom_call.1} parent=1 // pred_fallthru
      _
    // Predicated region
    $region14: #{tpu_custom_call.1} parent=1 // pred_check
      _
    $region15: #{tpu_custom_call.1} parent=1 // pred_check_branch
      %42 = sbr.rel (0) target = $region17
    $region16: #{tpu_custom_call.1} parent=1 // pred_region
      %44 = vsyncadd [#allocation7], 0
      %s45 = sshll.u32 %s3, 4
      %s46 = int_to_ptr.hbm [resolvable:$true] %s45
      %s47 = sshll.u32 [#allocation8], 4
      %s48 = int_to_ptr.vmem [resolvable:$true] %s47
      %53 = dma.hbm_to_vmem [thread:$0]  %s46, 2048, %s48, [#allocation7], 128, 128, 8
    $region17: #{tpu_custom_call.1} parent=1 // pred_fallthru
      _
    // Predicated region
    $region18: #{tpu_custom_call.1} parent=1 // pred_check
      _
    $region19: #{tpu_custom_call.1} parent=1 // pred_check_branch
      %55 = sbr.rel (0) target = $region21
    $region20: #{tpu_custom_call.1} parent=1 // pred_region
      _
    $region21: #{tpu_custom_call.1} parent=1 // pred_fallthru
      _
    // Predicated region
    $region22: #{tpu_custom_call.1} parent=1 // pred_check
      _
    $region23: #{tpu_custom_call.1} parent=1 // pred_check_branch
      %57 = sbr.rel (0) target = $region25
    $region24: #{tpu_custom_call.1} parent=1 // pred_region
      %59 = dma.done [#allocation4], 256
    $region25: #{tpu_custom_call.1} parent=1 // pred_fallthru
      _
    // Predicated region
    $region26: #{tpu_custom_call.1} parent=1 // pred_check
      _
    $region27: #{tpu_custom_call.1} parent=1 // pred_check_branch
      %61 = sbr.rel (0) target = $region29
    $region28: #{tpu_custom_call.1} parent=1 // pred_region
      %63 = dma.done [#allocation7], 2048
    $region29: #{tpu_custom_call.1} parent=1 // pred_fallthru
      _
    // Predicated region
    $region30: #{tpu_custom_call.1} parent=1 // pred_check
      _
    $region31: #{tpu_custom_call.1} parent=1 // pred_check_branch
      %65 = sbr.rel (0) target = $region33
    $region32: #{tpu_custom_call.1} parent=1 // pred_region
      %67 = dma.done [#allocation7], 2048
    $region33: #{tpu_custom_call.1} parent=1 // pred_fallthru
      _
    %p68 = scmp.eq.s32.totalorder 0, 0
    // Predicated region
    $region34: #{tpu_custom_call.1} parent=1 // pred_check
      %p69 = pneg %p68
    $region35: #{tpu_custom_call.1} parent=1 // pred_check_branch
      %71 = sbr.rel (%p69) target = $region37
    $region36: #{tpu_custom_call.1} parent=1 // pred_region
      %72 = vst [vmem:[#allocation2] sm:$0x3] 0.0
    $region37: #{tpu_custom_call.1} parent=1 // pred_fallthru
      _
    %v73 = vld [vmem:[#allocation3] sm:$0xff]
    %v74 = vld [vmem:[#allocation3 + $0x8] sm:$0xff]
    %v75 = vld [vmem:[#allocation2] sm:$0x3]
    %v76 = vrot.slane %v73, 4
    %v77 = vadd.f32 %v73, %v76
    %v78 = vrot.slane %v77, 2
    %v79 = vadd.f32 %v77, %v78
    %v80 = vrot.slane %v79, 1
    %v81 = vadd.f32 %v79, %v80
    %v82 = vrot.slane %v74, 4
    %v83 = vadd.f32 %v74, %v82
    %v84 = vrot.slane %v83, 2
    %v85 = vadd.f32 %v83, %v84
    %v86 = vrot.slane %v85, 1
    %v87 = vadd.f32 %v85, %v86
    %vm90 = vcmask 1041409
    %v91 = vsel %vm90, %v87, %v81
    %v93 = vadd.f32 %v75, %v91
    %94 = vst [vmem:[#allocation2] sm:$0x3] %v93
    // Predicated region
    $region38: #{tpu_custom_call.1} parent=1 // pred_check
      %p95 = pneg %p68
    $region39: #{tpu_custom_call.1} parent=1 // pred_check_branch
      %97 = sbr.rel (%p95) target = $region41
    $region40: #{tpu_custom_call.1} parent=1 // pred_region
      %v98 = vld [vmem:[#allocation2] sm:$0x3]
      %v99 = vmul.f32 %v98, 0.125
      %v100 = vld [vmem:[#allocation6] sm:$0xff]
      %v101 = vld [vmem:[#allocation6 + $0x8] sm:$0xff]
      %v102 = vld [vmem:[#allocation6 + $0x10] sm:$0xff]
      %v103 = vld [vmem:[#allocation6 + $0x18] sm:$0xff]
      %v104 = vld [vmem:[#allocation6 + $0x20] sm:$0xff]
      %v105 = vld [vmem:[#allocation6 + $0x28] sm:$0xff]
      %v106 = vld [vmem:[#allocation6 + $0x30] sm:$0xff]
      %v107 = vld [vmem:[#allocation6 + $0x38] sm:$0xff]
      %v108 = vld [vmem:[#allocation6 + $0x40] sm:$0xff]
      %v109 = vld [vmem:[#allocation6 + $0x48] sm:$0xff]
      %v110 = vld [vmem:[#allocation6 + $0x50] sm:$0xff]
      %v111 = vld [vmem:[#allocation6 + $0x58] sm:$0xff]
      %v112 = vld [vmem:[#allocation6 + $0x60] sm:$0xff]
      %v113 = vld [vmem:[#allocation6 + $0x68] sm:$0xff]
      %v114 = vld [vmem:[#allocation6 + $0x70] sm:$0xff]
      %v115 = vld [vmem:[#allocation6 + $0x78] sm:$0xff]
      %v116 = vld [vmem:[%s2] sm:$0x1]
      %v118 = vperm.slane %v116, 0
      %120 = vmatpush.msra.mxu0 %v115
      %121 = vmatpush.msra.mxu0 %v114
      %122 = vmatpush.msra.mxu0 %v113
      %123 = vmatpush.msra.mxu0 %v112
      %124 = vmatpush.msra.mxu0 %v111
      %125 = vmatpush.msra.mxu0 %v110
      %126 = vmatpush.msra.mxu0 %v109
      %127 = vmatpush.msra.mxu0 %v108
      %128 = vmatpush.msra.mxu0 %v107
      %129 = vmatpush.msra.mxu0 %v106
      %130 = vmatpush.msra.mxu0 %v105
      %131 = vmatpush.msra.mxu0 %v104
      %132 = vmatpush.msra.mxu0 %v103
      %133 = vmatpush.msra.mxu0 %v102
      %134 = vmatpush.msra.mxu0 %v101
      %135 = vmatpush.msra.mxu0 %v100
      %136 = vmatmul.f32.gmra.mxu0 %v99
      %v137 = vpop.f32.mrf.mxu0
      %v138 = vadd.f32 %v118, %v137
      %139 = vdwg.mxu0
      %v140 = vmax.f32 %v138, 0.0
      %v141 = vld [vmem:[#allocation8] sm:$0xff]
      %v142 = vld [vmem:[#allocation8 + $0x8] sm:$0xff]
      %v143 = vld [vmem:[#allocation8 + $0x10] sm:$0xff]
      %v144 = vld [vmem:[#allocation8 + $0x18] sm:$0xff]
      %v145 = vld [vmem:[#allocation8 + $0x20] sm:$0xff]
      %v146 = vld [vmem:[#allocation8 + $0x28] sm:$0xff]
      %v147 = vld [vmem:[#allocation8 + $0x30] sm:$0xff]
      %v148 = vld [vmem:[#allocation8 + $0x38] sm:$0xff]
      %v149 = vld [vmem:[#allocation8 + $0x40] sm:$0xff]
      %v150 = vld [vmem:[#allocation8 + $0x48] sm:$0xff]
      %v151 = vld [vmem:[#allocation8 + $0x50] sm:$0xff]
      %v152 = vld [vmem:[#allocation8 + $0x58] sm:$0xff]
      %v153 = vld [vmem:[#allocation8 + $0x60] sm:$0xff]
      %v154 = vld [vmem:[#allocation8 + $0x68] sm:$0xff]
      %v155 = vld [vmem:[#allocation8 + $0x70] sm:$0xff]
      %v156 = vld [vmem:[#allocation8 + $0x78] sm:$0xff]
      %v157 = vld [vmem:[%s4] sm:$0x1]
      %v159 = vperm.slane %v157, 0
      %161 = vmatpush.msra.mxu0 %v156
      %162 = vmatpush.msra.mxu0 %v155
      %163 = vmatpush.msra.mxu0 %v154
      %164 = vmatpush.msra.mxu0 %v153
      %165 = vmatpush.msra.mxu0 %v152
      %166 = vmatpush.msra.mxu0 %v151
      %167 = vmatpush.msra.mxu0 %v150
      %168 = vmatpush.msra.mxu0 %v149
      %169 = vmatpush.msra.mxu0 %v148
      %170 = vmatpush.msra.mxu0 %v147
      %171 = vmatpush.msra.mxu0 %v146
      %172 = vmatpush.msra.mxu0 %v145
      %173 = vmatpush.msra.mxu0 %v144
      %174 = vmatpush.msra.mxu0 %v143
      %175 = vmatpush.msra.mxu0 %v142
      %176 = vmatpush.msra.mxu0 %v141
      %177 = vmatmul.f32.gmra.mxu0 %v140
      %v178 = vpop.f32.mrf.mxu0
      %v179 = vadd.f32 %v159, %v178
      %180 = vdwg.mxu0
      %181 = vst [vmem:[#allocation9] sm:$0x3] %v179
    $region41: #{tpu_custom_call.1} parent=1 // pred_fallthru
      _
    // Predicated region
    $region42: #{tpu_custom_call.1} parent=1 // pred_check
      _
    $region43: #{tpu_custom_call.1} parent=1 // pred_check_branch
      %183 = sbr.rel (0) target = $region45
    $region44: #{tpu_custom_call.1} parent=1 // pred_region
      %185 = vsyncadd [#allocation5], 0
      %s187 = sshll.u32 [#allocation9], 4
      %s188 = int_to_ptr.vmem [resolvable:$true] %s187
      %s189 = sshll.u32 %s5, 4
      %s190 = int_to_ptr.hbm [resolvable:$true] %s189
      %192 = dma.vmem_to_hbm [thread:$0]  %s188, 32, %s190, [#allocation5]
    $region45: #{tpu_custom_call.1} parent=1 // pred_fallthru
      _
    // Predicated region
    $region46: #{tpu_custom_call.1} parent=1 // pred_check
      _
    $region47: #{tpu_custom_call.1} parent=1 // pred_check_branch
      %194 = sbr.rel (0) target = $region49
    $region48: #{tpu_custom_call.1} parent=1 // pred_region
      %196 = dma.done [#allocation5], 32
    $region49: #{tpu_custom_call.1} parent=1 // pred_fallthru
      _
    %197 = vsyncpa [#allocation4], 1
    %198 = vsyncpa [#allocation7], 1
    %199 = vsyncpa [#allocation5], 1

</llo_original>
